<compile_context>
chip_gen: v6e
topology: v6e:2x2x1
jax: 0.10.0
libtpu: 0.0.40
codegen_flags: <defaults>
</compile_context>

<pallas_src>
import jax
import jax.numpy as jnp
from jax.experimental import pallas as pl
from jax.experimental.pallas import tpu as pltpu

_TILE_N = 512                      # rows per grid step (f32)
_VMEM_LIMIT = 48 * 1024 * 1024     # fits v5e/v6e (128 MiB) and v7x (64 MiB)


def _round_up(x, m):
    return (x + m - 1) // m * m


def _sub_embed_classifier_kernel(x1_ref, x2_ref, wT_ref, b_ref, o_ref):
    # d = (x1 - x2)^2 in f32 (inputs may be bf16); BN already folded into wT/b.
    d = x1_ref[...].astype(jnp.float32) - x2_ref[...].astype(jnp.float32)
    o_ref[...] = (
        jnp.dot(d * d, wT_ref[...], preferred_element_type=jnp.float32)
        + b_ref[...])


def _sub_embed_sum_kernel(x1_ref, x2_ref, o_ref):
    # d = (x1 - x2)^2 ; exact f32 reduce over the feature (lane) axis.
    d = x1_ref[...].astype(jnp.float32) - x2_ref[...].astype(jnp.float32)
    o_ref[...] = jnp.sum(d * d, axis=1, keepdims=True)


@jax.jit
def eltwise_sub_embed_classifier(x1, x2, gamma, beta, running_mean,
                                 running_var, w, b, eps=1e-5):
    """EltwiseSubEmbed with use_batch_norm=True, use_classifier=True."""
    N, F = x1.shape
    C = w.shape[0]

    # Fold inference BN (y*scale + shift) into the classifier weights once,
    # on the small (F, C) tensors (NOT the big N*F inputs).
    scale = (gamma.astype(jnp.float32)
             / jnp.sqrt(running_var.astype(jnp.float32) + eps))
    shift = beta.astype(jnp.float32) - running_mean.astype(jnp.float32) * scale
    wT = jnp.transpose(w).astype(jnp.float32)                 # (F, C)
    wT_fused = scale[:, None] * wT                            # (F, C)
    b_fused = shift @ wT + b.astype(jnp.float32)              # (C,)

    # Pad C to a lane-dense multiple of 128 (zero columns, sliced off below).
    c_pad = _round_up(max(C, 128), 128)
    if c_pad != C:
        wT_fused = jnp.pad(wT_fused, ((0, 0), (0, c_pad - C)))
        b_fused = jnp.pad(b_fused, (0, c_pad - C))
    b_fused = b_fused.reshape(1, c_pad)

    # Tile the batch dim; pad N up to a whole number of tiles.
    tile_n = min(_TILE_N, _round_up(N, 8))
    n_pad = _round_up(N, tile_n)
    if n_pad != N:
        x1 = jnp.pad(x1, ((0, n_pad - N), (0, 0)))
        x2 = jnp.pad(x2, ((0, n_pad - N), (0, 0)))

    out = pl.pallas_call(
        _sub_embed_classifier_kernel,
        out_shape=jax.ShapeDtypeStruct((n_pad, c_pad), jnp.float32),
        grid=(n_pad // tile_n,),
        in_specs=[
            pl.BlockSpec((tile_n, F), lambda i: (i, 0)),      # x1 tile
            pl.BlockSpec((tile_n, F), lambda i: (i, 0)),      # x2 tile
            pl.BlockSpec((F, c_pad), lambda i: (0, 0)),       # weight, resident
            pl.BlockSpec((1, c_pad), lambda i: (0, 0)),       # bias, resident
        ],
        out_specs=pl.BlockSpec((tile_n, c_pad), lambda i: (i, 0)),
        compiler_params=pltpu.CompilerParams(
            dimension_semantics=("parallel",),
            vmem_limit_bytes=_VMEM_LIMIT),
    )(x1, x2, wT_fused, b_fused)
    return out[:N, :C]


@jax.jit
def eltwise_sub_embed_sum(x1, x2):
    """EltwiseSubEmbed with defaults (square nonlinearity, sum over dim 1)."""
    N, F = x1.shape
    tile_n = min(_TILE_N, _round_up(N, 8))
    n_pad = _round_up(N, tile_n)
    if n_pad != N:
        x1 = jnp.pad(x1, ((0, n_pad - N), (0, 0)))
        x2 = jnp.pad(x2, ((0, n_pad - N), (0, 0)))

    out = pl.pallas_call(
        _sub_embed_sum_kernel,
        out_shape=jax.ShapeDtypeStruct((n_pad, 1), jnp.float32),
        grid=(n_pad // tile_n,),
        in_specs=[
            pl.BlockSpec((tile_n, F), lambda i: (i, 0)),
            pl.BlockSpec((tile_n, F), lambda i: (i, 0)),
        ],
        out_specs=pl.BlockSpec((tile_n, 1), lambda i: (i, 0)),
        compiler_params=pltpu.CompilerParams(
            dimension_semantics=("parallel",),
            vmem_limit_bytes=_VMEM_LIMIT),
    )(x1, x2)
    return out[:N, 0]                       # matches torch x.sum(1) -> (N,)


if __name__ == "__main__":
    key = jax.random.PRNGKey(0)
    N, F, C = 8, 32, 8
    k1, k2, kw, kb, kg, kbe, km, kv = jax.random.split(key, 8)

    x1 = jax.random.normal(k1, (N, F), dtype=jnp.float32)
    x2 = jax.random.normal(k2, (N, F), dtype=jnp.float32)

    # Non-trivial BN stats so the folded affine is actually exercised.
    gamma = 1.0 + 0.1 * jax.random.normal(kg, (F,), dtype=jnp.float32)
    beta = 0.1 * jax.random.normal(kbe, (F,), dtype=jnp.float32)
    running_mean = 0.5 * jax.random.normal(km, (F,), dtype=jnp.float32)
    running_var = 0.5 + jax.nn.softplus(
        jax.random.normal(kv, (F,), dtype=jnp.float32))

    w = 0.001 * jax.random.normal(kw, (C, F), dtype=jnp.float32)
    b = 0.01 * jax.random.normal(kb, (C,), dtype=jnp.float32)
    eps = 1e-5

    # Path (a): BN + classifier.
    y_cls = jax.block_until_ready(
        eltwise_sub_embed_classifier(x1, x2, gamma, beta,
                                     running_mean, running_var, w, b, eps))

    # Path (b): default sum-over-features (f32, plus a bf16-input smoke test).
    y_sum = jax.block_until_ready(eltwise_sub_embed_sum(x1, x2))
    y_sum_bf16 = jax.block_until_ready(
        eltwise_sub_embed_sum(x1.astype(jnp.bfloat16), x2.astype(jnp.bfloat16)))

    # Pure-JAX references.
    d = (x1 - x2) ** 2
    ref_cls = ((d - running_mean) / jnp.sqrt(running_var + eps) * gamma
               + beta) @ w.T + b
    ref_sum = d.sum(axis=1)

    assert y_cls.shape == (N, C) and y_sum.shape == (N,)
    assert jnp.allclose(y_cls, ref_cls, atol=1e-4, rtol=1e-4), \
        float(jnp.max(jnp.abs(y_cls - ref_cls)))
    assert jnp.allclose(y_sum, ref_sum, atol=1e-4, rtol=1e-5), \
        float(jnp.max(jnp.abs(y_sum - ref_sum)))
    assert jnp.allclose(y_sum_bf16, ref_sum, atol=0.5, rtol=5e-2)

    print("KERNEL_OK")
</pallas_src>

<mosaic_0001>
module attributes {stable_mosaic.version = 11 : i64} {
  func.func @_sub_embed_classifier_kernel(%arg0: i32, %arg1: memref<8x32xf32, #tpu.memory_space<vmem>>, %arg2: memref<8x32xf32, #tpu.memory_space<vmem>>, %arg3: memref<32x128xf32, #tpu.memory_space<vmem>>, %arg4: memref<1x128xf32, #tpu.memory_space<vmem>>, %arg5: memref<8x128xf32, #tpu.memory_space<vmem>>) attributes {dimension_semantics = [#tpu.dimension_semantics<parallel>], iteration_bounds = array<i64: 1>, scalar_prefetch = 0 : i64, scratch_operands = 0 : i64, tpu.core_type = #tpu.core_type<tc>, window_params = [{transform_indices = @transform_0, window_bounds = array<i64: 8, 32>}, {transform_indices = @transform_1, window_bounds = array<i64: 8, 32>}, {pipeline_mode = #tpu.pipeline_mode<synchronous>, transform_indices = @transform_2, window_bounds = array<i64: 32, 128>}, {pipeline_mode = #tpu.pipeline_mode<synchronous>, transform_indices = @transform_3, window_bounds = array<i64: 1, 128>}, {transform_indices = @transform_4, window_bounds = array<i64: 8, 128>}]} {
    %c0 = arith.constant 0 : index
    %c0_0 = arith.constant 0 : index
    %0 = vector.load %arg1[%c0, %c0_0] : memref<8x32xf32, #tpu.memory_space<vmem>>, vector<8x32xf32>
    %c0_1 = arith.constant 0 : index
    %c0_2 = arith.constant 0 : index
    %1 = vector.load %arg2[%c0_1, %c0_2] : memref<8x32xf32, #tpu.memory_space<vmem>>, vector<8x32xf32>
    %2 = arith.subf %0, %1 : vector<8x32xf32>
    %3 = arith.mulf %2, %2 : vector<8x32xf32>
    %c0_3 = arith.constant 0 : index
    %c0_4 = arith.constant 0 : index
    %4 = vector.load %arg3[%c0_3, %c0_4] : memref<32x128xf32, #tpu.memory_space<vmem>>, vector<32x128xf32>
    %cst = arith.constant dense<0.000000e+00> : vector<8x128xf32>
    %5 = tpu.matmul %3, %4, %cst {dimension_numbers = #tpu.dot_dimension_numbers<[1], [0], [0], [1], [0, 0, 1, 1], [], []>} : vector<8x32xf32>, vector<32x128xf32>, vector<8x128xf32> -> vector<8x128xf32>
    %c0_5 = arith.constant 0 : index
    %c0_6 = arith.constant 0 : index
    %6 = vector.load %arg4[%c0_5, %c0_6] : memref<1x128xf32, #tpu.memory_space<vmem>>, vector<1x128xf32>
    %7 = vector.broadcast %6 : vector<1x128xf32> to vector<8x128xf32>
    %8 = arith.addf %5, %7 : vector<8x128xf32>
    %c0_7 = arith.constant 0 : index
    %c0_8 = arith.constant 0 : index
    %9 = vector.load %arg5[%c0_7, %c0_8] : memref<8x128xf32, #tpu.memory_space<vmem>>, vector<8x128xf32>
    tpu.vector_store %arg5[%c0_7, %c0_8], %8 {strides = array<i32>} : memref<8x128xf32, #tpu.memory_space<vmem>>, vector<8x128xf32>,
    return
  }
  func.func @transform_0(%arg0: i32) -> (i32, i32) {
    %c0_i32 = arith.constant 0 : i32
    %c0_i32_0 = arith.constant 0 : i32
    return %arg0, %c0_i32 : i32, i32
  }
  func.func @transform_1(%arg0: i32) -> (i32, i32) {
    %c0_i32 = arith.constant 0 : i32
    %c0_i32_0 = arith.constant 0 : i32
    return %arg0, %c0_i32 : i32, i32
  }
  func.func @transform_2(%arg0: i32) -> (i32, i32) {
    %c0_i32 = arith.constant 0 : i32
    %c0_i32_0 = arith.constant 0 : i32
    %c0_i32_1 = arith.constant 0 : i32
    return %c0_i32, %c0_i32_0 : i32, i32
  }
  func.func @transform_3(%arg0: i32) -> (i32, i32) {
    %c0_i32 = arith.constant 0 : i32
    %c0_i32_0 = arith.constant 0 : i32
    %c0_i32_1 = arith.constant 0 : i32
    return %c0_i32, %c0_i32_0 : i32, i32
  }
  func.func @transform_4(%arg0: i32) -> (i32, i32) {
    %c0_i32 = arith.constant 0 : i32
    %c0_i32_0 = arith.constant 0 : i32
    return %arg0, %c0_i32 : i32, i32
  }
}

</mosaic_0001>

<llo_original>
// kernel: eltwise_sub_embed_classifier.1
$region0: #{eltwise_sub_embed_classifier.1}
  #allocation0 [shape = 'u32[]', space=smem, size = 0x4, offset = 0x4, fixed_abs, tag = 'smem constant byte address 0x4 - core index']
  #allocation1 [shape = 'u32[144,128]{1,0:T(1,128)}', space=vmem, size = 0x12000, scoped, tag = 'internal scratch']
  %s0 = inlined_call_operand.vmem [shape: f32[8,32], index: 0, kind: input, shape index: {}]
  %s1 = inlined_call_operand.vmem [shape: f32[8,32], index: 1, kind: input, shape index: {}]
  %s2 = inlined_call_operand.vmem [shape: f32[32,128], index: 2, kind: input, shape index: {}]
  %s3 = inlined_call_operand.vmem [shape: f32[1,128], index: 3, kind: input, shape index: {}]
  %s4 = inlined_call_operand.hbm [shape: f32[8,128], index: 4, kind: output, shape index: {}]
  %s5 = sld [smem:[#allocation0]]
  $region26: #{eltwise_sub_embed_classifier.1} parent=0
    _
  %s7 = ssub.s32 1, %s5
  %s8 = scalar_select 0, %s7, %s5
  $region1: #{eltwise_sub_embed_classifier.1} parent=0
    #allocation2 [shape = 'u8[4096]{0}', space=vmem, size = 0x1000, scoped, tag = 'output window, operand 0, single buffered']
    #allocation3 [shape = 's32[1]{0}', space=sflag, size = 0x4, scoped, tag = 'scoped memory for eltwise_sub_embed_classifier.1']
    %9 = vsyncpa [#allocation3], 0
    // Predicated region
    $region2: #{eltwise_sub_embed_classifier.1} parent=1 // pred_check
      _
    $region3: #{eltwise_sub_embed_classifier.1} parent=1 // pred_check_branch
      %11 = sbr.rel (0) target = $region5
    $region4: #{eltwise_sub_embed_classifier.1} parent=1 // pred_region
      _
    $region5: #{eltwise_sub_embed_classifier.1} parent=1 // pred_fallthru
      _
    // Predicated region
    $region6: #{eltwise_sub_embed_classifier.1} parent=1 // pred_check
      _
    $region7: #{eltwise_sub_embed_classifier.1} parent=1 // pred_check_branch
      %13 = sbr.rel (0) target = $region9
    $region8: #{eltwise_sub_embed_classifier.1} parent=1 // pred_region
      _
    $region9: #{eltwise_sub_embed_classifier.1} parent=1 // pred_fallthru
      _
    // Predicated region
    $region10: #{eltwise_sub_embed_classifier.1} parent=1 // pred_check
      _
    $region11: #{eltwise_sub_embed_classifier.1} parent=1 // pred_check_branch
      %15 = sbr.rel (0) target = $region13
    $region12: #{eltwise_sub_embed_classifier.1} parent=1 // pred_region
      _
    $region13: #{eltwise_sub_embed_classifier.1} parent=1 // pred_fallthru
      _
    // Predicated region
    $region14: #{eltwise_sub_embed_classifier.1} parent=1 // pred_check
      _
    $region15: #{eltwise_sub_embed_classifier.1} parent=1 // pred_check_branch
      %17 = sbr.rel (0) target = $region17
    $region16: #{eltwise_sub_embed_classifier.1} parent=1 // pred_region
      _
    $region17: #{eltwise_sub_embed_classifier.1} parent=1 // pred_fallthru
      _
    %v18 = vld [vmem:[%s0] sm:$0xff]
    %v19 = vld [vmem:[%s1] sm:$0xff]
    %v20 = vsub.f32 %v18, %v19
    %v21 = vmul.f32 %v20, %v20
    %v22 = vld [vmem:[%s2] sm:$0xff]
    %v23 = vld [vmem:[%s2 + $0x8] sm:$0xff]
    %v24 = vld [vmem:[%s2 + $0x10] sm:$0xff]
    %v25 = vld [vmem:[%s2 + $0x18] sm:$0xff]
    %v26 = vld [vmem:[%s3] sm:$0x1]
    %v28 = vlaneseq
    %v29 = vshrl.u32 %v28, 7
    %v30 = vsub.s32 0, %v29
    %v31 = vrot.slane %v26, %v30
    %vm33 = vcmask 261120
    %v35 = vsel %vm33, %v21, 0
    %37 = vmatprep.subr.mxu0 0.0
    %38 = vmatpush1.msra.mxu0 0.0
    %39 = vmatprep.subr.mxu0 0.0
    %40 = vmatpush1.msra.mxu0 0.0
    %41 = vmatprep.subr.mxu0 0.0
    %42 = vmatpush1.msra.mxu0 0.0
    %43 = vmatprep.subr.mxu0 0.0
    %44 = vmatpush1.msra.mxu0 0.0
    %45 = vmatprep.subr.mxu0 0.0
    %46 = vmatpush1.msra.mxu0 0.0
    %47 = vmatprep.subr.mxu0 0.0
    %48 = vmatpush1.msra.mxu0 0.0
    %49 = vmatprep.subr.mxu0 0.0
    %50 = vmatpush1.msra.mxu0 0.0
    %51 = vmatprep.subr.mxu0 0.0
    %52 = vmatpush1.msra.mxu0 0.0
    %53 = vmatprep.subr.mxu0 0.0
    %54 = vmatpush1.msra.mxu0 0.0
    %55 = vmatprep.subr.mxu0 0.0
    %56 = vmatpush1.msra.mxu0 0.0
    %57 = vmatprep.subr.mxu0 0.0
    %58 = vmatpush1.msra.mxu0 0.0
    %59 = vmatprep.subr.mxu0 0.0
    %60 = vmatpush1.msra.mxu0 0.0
    %61 = vmatprep.subr.mxu0 0.0
    %62 = vmatpush1.msra.mxu0 %v25
    %63 = vmatprep.subr.mxu0 0.0
    %64 = vmatpush1.msra.mxu0 %v24
    %65 = vmatprep.subr.mxu0 0.0
    %66 = vmatpush1.msra.mxu0 %v23
    %67 = vmatprep.subr.mxu0 0.0
    %68 = vmatpush1.msra.mxu0 %v22
    %69 = vmatprep.subr.mxu0 0.0
    %70 = vmatpush2.msra.mxu0 0.0
    %71 = vmatprep.subr.mxu0 0.0
    %72 = vmatpush2.msra.mxu0 0.0
    %73 = vmatprep.subr.mxu0 0.0
    %74 = vmatpush2.msra.mxu0 0.0
    %75 = vmatprep.subr.mxu0 0.0
    %76 = vmatpush2.msra.mxu0 0.0
    %77 = vmatprep.subr.mxu0 0.0
    %78 = vmatpush2.msra.mxu0 0.0
    %79 = vmatprep.subr.mxu0 0.0
    %80 = vmatpush2.msra.mxu0 0.0
    %81 = vmatprep.subr.mxu0 0.0
    %82 = vmatpush2.msra.mxu0 0.0
    %83 = vmatprep.subr.mxu0 0.0
    %84 = vmatpush2.msra.mxu0 0.0
    %85 = vmatprep.subr.mxu0 0.0
    %86 = vmatpush2.msra.mxu0 0.0
    %87 = vmatprep.subr.mxu0 0.0
    %88 = vmatpush2.msra.mxu0 0.0
    %89 = vmatprep.subr.mxu0 0.0
    %90 = vmatpush2.msra.mxu0 0.0
    %91 = vmatprep.subr.mxu0 0.0
    %92 = vmatpush2.msra.mxu0 0.0
    %93 = vmatprep.subr.mxu0 0.0
    %94 = vmatpush2.msra.mxu0 0.0
    %95 = vmatprep.subr.mxu0 0.0
    %96 = vmatpush2.msra.mxu0 0.0
    %97 = vmatprep.subr.mxu0 0.0
    %98 = vmatpush2.msra.mxu0 0.0
    %99 = vmatprep.subr.mxu0 0.0
    %100 = vmatpush2.msra.mxu0 0.0
    %101 = vmatprep.mubr.f32.mxu0 0.0
    %102 = vmatmul.mubr.f32.gmra.mxu0 %v35
    %v103 = vpop.f32.mrf.mxu0
    %v104 = vadd.f32 %v31, %v103
    %v105 = vpop.f32.mrf.mxu0
    %106 = vdwg.mxu0
    %107 = vst [vmem:[#allocation2] sm:$0xff] %v104
    // Predicated region
    $region18: #{eltwise_sub_embed_classifier.1} parent=1 // pred_check
      _
    $region19: #{eltwise_sub_embed_classifier.1} parent=1 // pred_check_branch
      %109 = sbr.rel (0) target = $region21
    $region20: #{eltwise_sub_embed_classifier.1} parent=1 // pred_region
      %s111 = ssub.s32 128, 128
      %112 = vsyncadd [#allocation3], %s111
      %s114 = sshll.u32 [#allocation2], 4
      %s115 = int_to_ptr.vmem [resolvable:$true] %s114
      %117 = dma.vmem_to_hbm [thread:$0]  %s115, 128, %s4, [#allocation3]
    $region21: #{eltwise_sub_embed_classifier.1} parent=1 // pred_fallthru
      _
    // Predicated region
    $region22: #{eltwise_sub_embed_classifier.1} parent=1 // pred_check
      _
    $region23: #{eltwise_sub_embed_classifier.1} parent=1 // pred_check_branch
      %119 = sbr.rel (0) target = $region25
    $region24: #{eltwise_sub_embed_classifier.1} parent=1 // pred_region
      %120 = dma.done [#allocation3], 128
    $region25: #{eltwise_sub_embed_classifier.1} parent=1 // pred_fallthru
      _
    %121 = vsyncpa [#allocation3], 1

</llo_original>
